<compile_context>
chip_gen: v7x
topology: tpu7x:2x2x1
jax: 0.10.0
libtpu: 0.0.40
codegen_flags: <defaults>
</compile_context>

<pallas_src>
import functools

import jax
import jax.numpy as jnp
from jax.experimental import pallas as pl
from jax.experimental.pallas import tpu as pltpu


# ----------------------------------------------------------------------------
# Fused DoubleConv kernel (NB images per grid step, channel-major layout)
# ----------------------------------------------------------------------------
def _double_conv_kernel(x_ref, m_ref, w1_ref, b1_ref, w2_ref, b2_ref, o_ref,
                        pan1_ref, pan2_ref, *, W):
    # 0/1 boundary masks (periodic per image in the lane-concatenated block):
    # zero on the first/last row / column of every image.
    row_top = m_ref[0:1, :]
    row_bot = m_ref[1:2, :]
    col_lft = m_ref[2:3, :]
    col_rgt = m_ref[3:4, :]

    def conv3x3_bias_relu(inp, w_ref, b_ref, pan_ref):
        C, L = inp.shape
        # ky-shifted panels: lane roll by +/-W (XLU slot), boundary rows zeroed
        # on the VPU.  The panel scratch persists across grid steps and is
        # fully overwritten -> no memsets.  Wrap-around across image
        # boundaries only ever reaches masked positions.
        pan_ref[0:C, :] = (pltpu.roll(inp, W, axis=1) * row_top).astype(pan_ref.dtype)
        pan_ref[C:2 * C, :] = inp.astype(pan_ref.dtype)
        pan_ref[2 * C:3 * C, :] = (pltpu.roll(inp, L - W, axis=1)
                                   * row_bot).astype(pan_ref.dtype)
        pan = pan_ref[...]                                   # (3*C, L)

        # kx in {0,1,2}: three (M, 3C) x (3C, L) matmuls.  The +/-1 column
        # shift commutes with the matmul, so roll the (smaller) outputs and
        # mask the image-boundary columns there.
        zl = jnp.dot(w_ref[0], pan, preferred_element_type=jnp.float32)
        z0 = jnp.dot(w_ref[1], pan, preferred_element_type=jnp.float32)
        zr = jnp.dot(w_ref[2], pan, preferred_element_type=jnp.float32)
        acc = (z0
               + pltpu.roll(zl, 1, axis=1) * col_lft
               + pltpu.roll(zr, L - 1, axis=1) * col_rgt)
        return jnp.maximum(acc + b_ref[...], 0.0)            # f32 epilogue

    y1 = conv3x3_bias_relu(x_ref[...], w1_ref, b1_ref, pan1_ref)
    o_ref[...] = conv3x3_bias_relu(y1, w2_ref, b2_ref, pan2_ref).astype(o_ref.dtype)


# ----------------------------------------------------------------------------
# Wrapper helpers
# ----------------------------------------------------------------------------
def _fold_bn_into_conv(w_oihw, conv_bias, gamma, beta, mean, var, eps):
    scale = gamma / jnp.sqrt(var + eps)
    w = w_oihw * scale[:, None, None, None]
    bias = (conv_bias - mean) * scale + beta
    return w, bias


def _pack_weight(w_oihw, mxu_dtype):
    # OIHW -> one (Cout, 3*Cin) matrix per kx column offset: [kx, o, ky*Cin+ci]
    Cout, Cin = w_oihw.shape[0], w_oihw.shape[1]
    return jnp.transpose(w_oihw, (3, 0, 2, 1)).reshape(3, Cout, 3 * Cin).astype(mxu_dtype)


def _per_step_vmem_bytes(nb, HW, Cin, Cmid, Cout):
    lb = nb * HW
    # double-buffered in/out blocks + 3C panels (both stages) + live temporaries
    return 4 * lb * (2 * Cin + 3 * Cin + 3 * Cmid + 2 * Cmid + 4 * Cout + 4)


def _pick_images_per_step(N, HW, Cin, Cmid, Cout, budget_bytes=8 * 2 ** 20):
    """Largest #images per grid step with a small footprint and a lane extent
    that is either a multiple of 128 or the full array."""
    valid = [nb for nb in range(1, N + 1)
             if N % nb == 0 and (nb == N or (nb * HW) % 128 == 0)]
    within = [nb for nb in valid
              if _per_step_vmem_bytes(nb, HW, Cin, Cmid, Cout) <= budget_bytes]
    return max(within) if within else min(valid)


def double_conv(x_nchw, params, *, batch_norm=True, eps=1e-5,
                mxu_dtype=jnp.float32, images_per_step=None):
    """x_nchw: (N, Cin, H, W) f32.  Returns (N, Cout, H, W) f32 (NCHW)."""
    N, Cin, H, W = x_nchw.shape
    HW = H * W
    if batch_norm:
        w1, b1 = _fold_bn_into_conv(params["w1"], params["b1"], params["g1"],
                                    params["be1"], params["m1"], params["v1"], eps)
        w2, b2 = _fold_bn_into_conv(params["w2"], params["b2"], params["g2"],
                                    params["be2"], params["m2"], params["v2"], eps)
    else:
        w1, b1 = params["w1"], params["b1"]
        w2, b2 = params["w2"], params["b2"]
    Cmid, Cout = w1.shape[0], w2.shape[0]

    w1p = _pack_weight(w1, mxu_dtype)                        # (3, Cmid, 3*Cin)
    w2p = _pack_weight(w2, mxu_dtype)                        # (3, Cout, 3*Cmid)
    b1c = b1.reshape(Cmid, 1).astype(jnp.float32)
    b2c = b2.reshape(Cout, 1).astype(jnp.float32)

    NB = images_per_step or _pick_images_per_step(N, HW, Cin, Cmid, Cout)
    assert N % NB == 0, (N, NB)
    Lb = NB * HW

    # Channel-major, lane = N*H*W (lane-dense in/out; NB images share one MXU
    # weight hold per grid step).  Wrapper transposes are layout plumbing.
    x_cm = jnp.transpose(x_nchw.reshape(N, Cin, HW), (1, 0, 2))
    x_cm = x_cm.reshape(Cin, N * HW).astype(jnp.float32)

    # 0/1 image-boundary masks (periodic per image, so one NB-image block
    # serves every grid step; grid-invariant index_map => no re-DMA).
    pos = jnp.arange(HW)
    row, col = pos // W, pos % W
    masks = jnp.stack([row > 0, row < H - 1, col > 0, col < W - 1])
    masks = jnp.tile(masks.astype(jnp.float32), (1, NB))     # (4, Lb)

    flops = 2 * (Cmid * 9 * Cin + Cout * 9 * Cmid) * HW * N
    weight_bytes = ((w1p.size + w2p.size) * jnp.dtype(mxu_dtype).itemsize
                    + 4 * (b1c.size + b2c.size + masks.size))
    io_bytes = 4 * N * HW * (Cin + Cout)
    vmem_limit = int(min(
        100 * 2 ** 20,
        max(32 * 2 ** 20,
            2 * (_per_step_vmem_bytes(NB, HW, Cin, Cmid, Cout) + weight_bytes))))

    kernel = functools.partial(_double_conv_kernel, W=W)
    out_cm = pl.pallas_call(
        kernel,
        out_shape=jax.ShapeDtypeStruct((Cout, N * HW), jnp.float32),
        grid_spec=pltpu.PrefetchScalarGridSpec(
            num_scalar_prefetch=0,
            grid=(N // NB,),
            in_specs=[
                pl.BlockSpec((Cin, Lb), lambda n: (0, n)),
                pl.BlockSpec((4, Lb), lambda n: (0, 0)),
                # TODO(synk): at real UNet channel counts, single-buffer these
                # grid-invariant weights (pipeline_mode=pl.Buffered(1)) to
                # halve their VMEM footprint on v7x.
                pl.BlockSpec((3, Cmid, 3 * Cin), lambda n: (0, 0, 0)),
                pl.BlockSpec((Cmid, 1), lambda n: (0, 0)),
                pl.BlockSpec((3, Cout, 3 * Cmid), lambda n: (0, 0, 0)),
                pl.BlockSpec((Cout, 1), lambda n: (0, 0)),
            ],
            out_specs=pl.BlockSpec((Cout, Lb), lambda n: (0, n)),
            scratch_shapes=[
                pltpu.VMEM((3 * Cin, Lb), mxu_dtype),         # ky panels, stage 1
                pltpu.VMEM((3 * Cmid, Lb), mxu_dtype),        # ky panels, stage 2
            ],
        ),
        compiler_params=pltpu.CompilerParams(
            dimension_semantics=("parallel",),
            vmem_limit_bytes=vmem_limit),
        cost_estimate=pl.CostEstimate(flops=flops, transcendentals=0,
                                      bytes_accessed=io_bytes + weight_bytes),
    )(x_cm, masks, w1p, b1c, w2p, b2c)

    return jnp.transpose(out_cm.reshape(Cout, N, H, W), (1, 0, 2, 3))


# ----------------------------------------------------------------------------
# Pure-JAX reference (lax.conv, BN applied un-folded) for a correctness check
# ----------------------------------------------------------------------------
def _ref_double_conv(x, params, eps=1e-5):
    def conv_bn_relu(x, w, b, g, be, m, v):
        y = jax.lax.conv_general_dilated(
            x, w, window_strides=(1, 1), padding=((1, 1), (1, 1)),
            dimension_numbers=("NCHW", "OIHW", "NCHW"))
        y = y + b[None, :, None, None]
        s = g / jnp.sqrt(v + eps)
        y = (y - m[None, :, None, None]) * s[None, :, None, None] \
            + be[None, :, None, None]
        return jnp.maximum(y, 0.0)

    y = conv_bn_relu(x, params["w1"], params["b1"], params["g1"],
                     params["be1"], params["m1"], params["v1"])
    y = conv_bn_relu(y, params["w2"], params["b2"], params["g2"],
                     params["be2"], params["m2"], params["v2"])
    return y


if __name__ == "__main__":
    key = jax.random.PRNGKey(0)
    ks = jax.random.split(key, 13)

    # DoubleConv(in_channels=4, out_channels=4, mid_channels=8), eval-mode BN
    N, Cin, H, W = 2, 4, 16, 16
    Cmid, Cout = 8, 4

    x = jax.random.normal(ks[0], (N, Cin, H, W), jnp.float32)

    params = {
        "w1": 0.1 * jax.random.normal(ks[1], (Cmid, Cin, 3, 3)),    # OIHW
        "b1": 0.1 * jax.random.normal(ks[2], (Cmid,)),
        "g1": 1.0 + 0.1 * jax.random.normal(ks[3], (Cmid,)),
        "be1": 0.1 * jax.random.normal(ks[4], (Cmid,)),
        "m1": 0.1 * jax.random.normal(ks[5], (Cmid,)),
        "v1": 1.0 + 0.1 * jnp.abs(jax.random.normal(ks[6], (Cmid,))),
        "w2": 0.1 * jax.random.normal(ks[7], (Cout, Cmid, 3, 3)),
        "b2": 0.1 * jax.random.normal(ks[8], (Cout,)),
        "g2": 1.0 + 0.1 * jax.random.normal(ks[9], (Cout,)),
        "be2": 0.1 * jax.random.normal(ks[10], (Cout,)),
        "m2": 0.1 * jax.random.normal(ks[11], (Cout,)),
        "v2": 1.0 + 0.1 * jnp.abs(jax.random.normal(ks[12], (Cout,))),
    }
    params = {k: jnp.asarray(v, jnp.float32) for k, v in params.items()}

    out = jax.jit(functools.partial(double_conv, batch_norm=True))(x, params)
    out = jax.block_until_ready(out)
    assert out.shape == (N, Cout, H, W), out.shape

    ref = jax.block_until_ready(_ref_double_conv(x, params))
    max_err = float(jnp.max(jnp.abs(out - ref)))
    assert jnp.allclose(out, ref, atol=2e-3, rtol=2e-3), max_err

    print("KERNEL_OK")
</pallas_src>

<mosaic_0001>
module attributes {stable_mosaic.version = 11 : i64} {
  func.func @_double_conv_kernel(%arg0: i32, %arg1: memref<4x512xf32, #tpu.memory_space<vmem>>, %arg2: memref<4x512xf32, #tpu.memory_space<vmem>>, %arg3: memref<3x8x12xf32, #tpu.memory_space<vmem>>, %arg4: memref<8x1xf32, #tpu.memory_space<vmem>>, %arg5: memref<3x4x24xf32, #tpu.memory_space<vmem>>, %arg6: memref<4x1xf32, #tpu.memory_space<vmem>>, %arg7: memref<4x512xf32, #tpu.memory_space<vmem>>, %arg8: memref<12x512xf32, #tpu.memory_space<vmem>>, %arg9: memref<24x512xf32, #tpu.memory_space<vmem>>) attributes {dimension_semantics = [#tpu.dimension_semantics<parallel>], iteration_bounds = array<i64: 1>, scalar_prefetch = 0 : i64, scratch_operands = 2 : i64, tpu.core_type = #tpu.core_type<tc>, window_params = [{transform_indices = @transform_0, window_bounds = array<i64: 4, 512>}, {pipeline_mode = #tpu.pipeline_mode<synchronous>, transform_indices = @transform_1, window_bounds = array<i64: 4, 512>}, {pipeline_mode = #tpu.pipeline_mode<synchronous>, transform_indices = @transform_2, window_bounds = array<i64: 3, 8, 12>}, {pipeline_mode = #tpu.pipeline_mode<synchronous>, transform_indices = @transform_3, window_bounds = array<i64: 8, 1>}, {pipeline_mode = #tpu.pipeline_mode<synchronous>, transform_indices = @transform_4, window_bounds = array<i64: 3, 4, 24>}, {pipeline_mode = #tpu.pipeline_mode<synchronous>, transform_indices = @transform_5, window_bounds = array<i64: 4, 1>}, {transform_indices = @transform_6, window_bounds = array<i64: 4, 512>}]} {
    %c0 = arith.constant 0 : index
    %c0_0 = arith.constant 0 : index
    %0 = vector.load %arg2[%c0, %c0_0] : memref<4x512xf32, #tpu.memory_space<vmem>>, vector<1x512xf32>
    %c1 = arith.constant 1 : index
    %c0_1 = arith.constant 0 : index
    %1 = vector.load %arg2[%c1, %c0_1] : memref<4x512xf32, #tpu.memory_space<vmem>>, vector<1x512xf32>
    %c2 = arith.constant 2 : index
    %c0_2 = arith.constant 0 : index
    %2 = vector.load %arg2[%c2, %c0_2] : memref<4x512xf32, #tpu.memory_space<vmem>>, vector<1x512xf32>
    %c3 = arith.constant 3 : index
    %c0_3 = arith.constant 0 : index
    %3 = vector.load %arg2[%c3, %c0_3] : memref<4x512xf32, #tpu.memory_space<vmem>>, vector<1x512xf32>
    %c0_4 = arith.constant 0 : index
    %c0_5 = arith.constant 0 : index
    %4 = vector.load %arg1[%c0_4, %c0_5] : memref<4x512xf32, #tpu.memory_space<vmem>>, vector<4x512xf32>
    %c16_i32 = arith.constant 16 : i32
    %5 = tpu.dynamic_rotate %4 by %c16_i32 dim 1 : vector<4x512xf32>, i32 -> vector<4x512xf32>
    %6 = vector.broadcast %0 : vector<1x512xf32> to vector<4x512xf32>
    %7 = arith.mulf %5, %6 : vector<4x512xf32>
    %c0_6 = arith.constant 0 : index
    %c0_7 = arith.constant 0 : index
    %8 = vector.load %arg8[%c0_6, %c0_7] : memref<12x512xf32, #tpu.memory_space<vmem>>, vector<4x512xf32>
    tpu.vector_store %arg8[%c0_6, %c0_7], %7 {strides = array<i32>} : memref<12x512xf32, #tpu.memory_space<vmem>>, vector<4x512xf32>,
    %c4 = arith.constant 4 : index
    %c0_8 = arith.constant 0 : index
    %9 = vector.load %arg8[%c4, %c0_8] : memref<12x512xf32, #tpu.memory_space<vmem>>, vector<4x512xf32>
    tpu.vector_store %arg8[%c4, %c0_8], %4 {strides = array<i32>} : memref<12x512xf32, #tpu.memory_space<vmem>>, vector<4x512xf32>,
    %c496_i32 = arith.constant 496 : i32
    %10 = tpu.dynamic_rotate %4 by %c496_i32 dim 1 : vector<4x512xf32>, i32 -> vector<4x512xf32>
    %11 = vector.broadcast %1 : vector<1x512xf32> to vector<4x512xf32>
    %12 = arith.mulf %10, %11 : vector<4x512xf32>
    %c8 = arith.constant 8 : index
    %c0_9 = arith.constant 0 : index
    %13 = vector.load %arg8[%c8, %c0_9] : memref<12x512xf32, #tpu.memory_space<vmem>>, vector<4x512xf32>
    tpu.vector_store %arg8[%c8, %c0_9], %12 {strides = array<i32>} : memref<12x512xf32, #tpu.memory_space<vmem>>, vector<4x512xf32>,
    %c0_10 = arith.constant 0 : index
    %c0_11 = arith.constant 0 : index
    %14 = vector.load %arg8[%c0_10, %c0_11] : memref<12x512xf32, #tpu.memory_space<vmem>>, vector<12x512xf32>
    %c0_12 = arith.constant 0 : index
    %c0_13 = arith.constant 0 : index
    %c0_14 = arith.constant 0 : index
    %15 = vector.load %arg3[%c0_12, %c0_13, %c0_14] : memref<3x8x12xf32, #tpu.memory_space<vmem>>, vector<1x8x12xf32>
    %16 = vector.shape_cast %15 : vector<1x8x12xf32> to vector<8x12xf32>
    %cst = arith.constant dense<0.000000e+00> : vector<8x512xf32>
    %17 = tpu.matmul %16, %14, %cst {dimension_numbers = #tpu.dot_dimension_numbers<[1], [0], [0], [1], [0, 0, 1, 1], [], []>} : vector<8x12xf32>, vector<12x512xf32>, vector<8x512xf32> -> vector<8x512xf32>
    %c1_15 = arith.constant 1 : index
    %c0_16 = arith.constant 0 : index
    %c0_17 = arith.constant 0 : index
    %18 = vector.load %arg3[%c1_15, %c0_16, %c0_17] : memref<3x8x12xf32, #tpu.memory_space<vmem>>, vector<1x8x12xf32>
    %19 = vector.shape_cast %18 : vector<1x8x12xf32> to vector<8x12xf32>
    %cst_18 = arith.constant dense<0.000000e+00> : vector<8x512xf32>
    %20 = tpu.matmul %19, %14, %cst_18 {dimension_numbers = #tpu.dot_dimension_numbers<[1], [0], [0], [1], [0, 0, 1, 1], [], []>} : vector<8x12xf32>, vector<12x512xf32>, vector<8x512xf32> -> vector<8x512xf32>
    %c2_19 = arith.constant 2 : index
    %c0_20 = arith.constant 0 : index
    %c0_21 = arith.constant 0 : index
    %21 = vector.load %arg3[%c2_19, %c0_20, %c0_21] : memref<3x8x12xf32, #tpu.memory_space<vmem>>, vector<1x8x12xf32>
    %22 = vector.shape_cast %21 : vector<1x8x12xf32> to vector<8x12xf32>
    %cst_22 = arith.constant dense<0.000000e+00> : vector<8x512xf32>
    %23 = tpu.matmul %22, %14, %cst_22 {dimension_numbers = #tpu.dot_dimension_numbers<[1], [0], [0], [1], [0, 0, 1, 1], [], []>} : vector<8x12xf32>, vector<12x512xf32>, vector<8x512xf32> -> vector<8x512xf32>
    %c1_i32 = arith.constant 1 : i32
    %24 = tpu.dynamic_rotate %17 by %c1_i32 dim 1 : vector<8x512xf32>, i32 -> vector<8x512xf32>
    %25 = vector.broadcast %2 : vector<1x512xf32> to vector<8x512xf32>
    %26 = arith.mulf %24, %25 : vector<8x512xf32>
    %27 = arith.addf %20, %26 : vector<8x512xf32>
    %c511_i32 = arith.constant 511 : i32
    %28 = tpu.dynamic_rotate %23 by %c511_i32 dim 1 : vector<8x512xf32>, i32 -> vector<8x512xf32>
    %29 = vector.broadcast %3 : vector<1x512xf32> to vector<8x512xf32>
    %30 = arith.mulf %28, %29 : vector<8x512xf32>
    %31 = arith.addf %27, %30 : vector<8x512xf32>
    %c0_23 = arith.constant 0 : index
    %c0_24 = arith.constant 0 : index
    %32 = vector.load %arg4[%c0_23, %c0_24] : memref<8x1xf32, #tpu.memory_space<vmem>>, vector<8x1xf32>
    %33 = vector.broadcast %32 : vector<8x1xf32> to vector<8x512xf32>
    %34 = arith.addf %31, %33 : vector<8x512xf32>
    %cst_25 = arith.constant 0.000000e+00 : f32
    %35 = vector.broadcast %cst_25 : f32 to vector<8x512xf32>
    %36 = arith.maximumf %34, %35 : vector<8x512xf32>
    %c16_i32_26 = arith.constant 16 : i32
    %37 = tpu.dynamic_rotate %36 by %c16_i32_26 dim 1 : vector<8x512xf32>, i32 -> vector<8x512xf32>
    %38 = vector.broadcast %0 : vector<1x512xf32> to vector<8x512xf32>
    %39 = arith.mulf %37, %38 : vector<8x512xf32>
    %c0_27 = arith.constant 0 : index
    %c0_28 = arith.constant 0 : index
    %40 = vector.load %arg9[%c0_27, %c0_28] : memref<24x512xf32, #tpu.memory_space<vmem>>, vector<8x512xf32>
    tpu.vector_store %arg9[%c0_27, %c0_28], %39 {strides = array<i32>} : memref<24x512xf32, #tpu.memory_space<vmem>>, vector<8x512xf32>,
    %c8_29 = arith.constant 8 : index
    %c0_30 = arith.constant 0 : index
    %41 = vector.load %arg9[%c8_29, %c0_30] : memref<24x512xf32, #tpu.memory_space<vmem>>, vector<8x512xf32>
    tpu.vector_store %arg9[%c8_29, %c0_30], %36 {strides = array<i32>} : memref<24x512xf32, #tpu.memory_space<vmem>>, vector<8x512xf32>,
    %c496_i32_31 = arith.constant 496 : i32
    %42 = tpu.dynamic_rotate %36 by %c496_i32_31 dim 1 : vector<8x512xf32>, i32 -> vector<8x512xf32>
    %43 = vector.broadcast %1 : vector<1x512xf32> to vector<8x512xf32>
    %44 = arith.mulf %42, %43 : vector<8x512xf32>
    %c16 = arith.constant 16 : index
    %c0_32 = arith.constant 0 : index
    %45 = vector.load %arg9[%c16, %c0_32] : memref<24x512xf32, #tpu.memory_space<vmem>>, vector<8x512xf32>
    tpu.vector_store %arg9[%c16, %c0_32], %44 {strides = array<i32>} : memref<24x512xf32, #tpu.memory_space<vmem>>, vector<8x512xf32>,
    %c0_33 = arith.constant 0 : index
    %c0_34 = arith.constant 0 : index
    %46 = vector.load %arg9[%c0_33, %c0_34] : memref<24x512xf32, #tpu.memory_space<vmem>>, vector<24x512xf32>
    %c0_35 = arith.constant 0 : index
    %c0_36 = arith.constant 0 : index
    %c0_37 = arith.constant 0 : index
    %47 = vector.load %arg5[%c0_35, %c0_36, %c0_37] : memref<3x4x24xf32, #tpu.memory_space<vmem>>, vector<1x4x24xf32>
    %48 = vector.shape_cast %47 : vector<1x4x24xf32> to vector<4x24xf32>
    %cst_38 = arith.constant dense<0.000000e+00> : vector<4x512xf32>
    %49 = tpu.matmul %48, %46, %cst_38 {dimension_numbers = #tpu.dot_dimension_numbers<[1], [0], [0], [1], [0, 0, 1, 1], [], []>} : vector<4x24xf32>, vector<24x512xf32>, vector<4x512xf32> -> vector<4x512xf32>
    %c1_39 = arith.constant 1 : index
    %c0_40 = arith.constant 0 : index
    %c0_41 = arith.constant 0 : index
    %50 = vector.load %arg5[%c1_39, %c0_40, %c0_41] : memref<3x4x24xf32, #tpu.memory_space<vmem>>, vector<1x4x24xf32>
    %51 = vector.shape_cast %50 : vector<1x4x24xf32> to vector<4x24xf32>
    %cst_42 = arith.constant dense<0.000000e+00> : vector<4x512xf32>
    %52 = tpu.matmul %51, %46, %cst_42 {dimension_numbers = #tpu.dot_dimension_numbers<[1], [0], [0], [1], [0, 0, 1, 1], [], []>} : vector<4x24xf32>, vector<24x512xf32>, vector<4x512xf32> -> vector<4x512xf32>
    %c2_43 = arith.constant 2 : index
    %c0_44 = arith.constant 0 : index
    %c0_45 = arith.constant 0 : index
    %53 = vector.load %arg5[%c2_43, %c0_44, %c0_45] : memref<3x4x24xf32, #tpu.memory_space<vmem>>, vector<1x4x24xf32>
    %54 = vector.shape_cast %53 : vector<1x4x24xf32> to vector<4x24xf32>
    %cst_46 = arith.constant dense<0.000000e+00> : vector<4x512xf32>
    %55 = tpu.matmul %54, %46, %cst_46 {dimension_numbers = #tpu.dot_dimension_numbers<[1], [0], [0], [1], [0, 0, 1, 1], [], []>} : vector<4x24xf32>, vector<24x512xf32>, vector<4x512xf32> -> vector<4x512xf32>
    %c1_i32_47 = arith.constant 1 : i32
    %56 = tpu.dynamic_rotate %49 by %c1_i32_47 dim 1 : vector<4x512xf32>, i32 -> vector<4x512xf32>
    %57 = vector.broadcast %2 : vector<1x512xf32> to vector<4x512xf32>
    %58 = arith.mulf %56, %57 : vector<4x512xf32>
    %59 = arith.addf %52, %58 : vector<4x512xf32>
    %c511_i32_48 = arith.constant 511 : i32
    %60 = tpu.dynamic_rotate %55 by %c511_i32_48 dim 1 : vector<4x512xf32>, i32 -> vector<4x512xf32>
    %61 = vector.broadcast %3 : vector<1x512xf32> to vector<4x512xf32>
    %62 = arith.mulf %60, %61 : vector<4x512xf32>
    %63 = arith.addf %59, %62 : vector<4x512xf32>
    %c0_49 = arith.constant 0 : index
    %c0_50 = arith.constant 0 : index
    %64 = vector.load %arg6[%c0_49, %c0_50] : memref<4x1xf32, #tpu.memory_space<vmem>>, vector<4x1xf32>
    %65 = vector.broadcast %64 : vector<4x1xf32> to vector<4x512xf32>
    %66 = arith.addf %63, %65 : vector<4x512xf32>
    %cst_51 = arith.constant 0.000000e+00 : f32
    %67 = vector.broadcast %cst_51 : f32 to vector<4x512xf32>
    %68 = arith.maximumf %66, %67 : vector<4x512xf32>
    %c0_52 = arith.constant 0 : index
    %c0_53 = arith.constant 0 : index
    %69 = vector.load %arg7[%c0_52, %c0_53] : memref<4x512xf32, #tpu.memory_space<vmem>>, vector<4x512xf32>
    tpu.vector_store %arg7[%c0_52, %c0_53], %68 {strides = array<i32>} : memref<4x512xf32, #tpu.memory_space<vmem>>, vector<4x512xf32>,
    return
  }
  func.func @transform_0(%arg0: i32) -> (i32, i32) {
    %c0_i32 = arith.constant 0 : i32
    %c0_i32_0 = arith.constant 0 : i32
    return %c0_i32, %arg0 : i32, i32
  }
  func.func @transform_1(%arg0: i32) -> (i32, i32) {
    %c0_i32 = arith.constant 0 : i32
    %c0_i32_0 = arith.constant 0 : i32
    %c0_i32_1 = arith.constant 0 : i32
    return %c0_i32, %c0_i32_0 : i32, i32
  }
  func.func @transform_2(%arg0: i32) -> (i32, i32, i32) {
    %c0_i32 = arith.constant 0 : i32
    %c0_i32_0 = arith.constant 0 : i32
    %c0_i32_1 = arith.constant 0 : i32
    %c0_i32_2 = arith.constant 0 : i32
    return %c0_i32, %c0_i32_0, %c0_i32_1 : i32, i32, i32
  }
  func.func @transform_3(%arg0: i32) -> (i32, i32) {
    %c0_i32 = arith.constant 0 : i32
    %c0_i32_0 = arith.constant 0 : i32
    %c0_i32_1 = arith.constant 0 : i32
    return %c0_i32, %c0_i32_0 : i32, i32
  }
  func.func @transform_4(%arg0: i32) -> (i32, i32, i32) {
    %c0_i32 = arith.constant 0 : i32
    %c0_i32_0 = arith.constant 0 : i32
    %c0_i32_1 = arith.constant 0 : i32
    %c0_i32_2 = arith.constant 0 : i32
    return %c0_i32, %c0_i32_0, %c0_i32_1 : i32, i32, i32
  }
  func.func @transform_5(%arg0: i32) -> (i32, i32) {
    %c0_i32 = arith.constant 0 : i32
    %c0_i32_0 = arith.constant 0 : i32
    %c0_i32_1 = arith.constant 0 : i32
    return %c0_i32, %c0_i32_0 : i32, i32
  }
  func.func @transform_6(%arg0: i32) -> (i32, i32) {
    %c0_i32 = arith.constant 0 : i32
    %c0_i32_0 = arith.constant 0 : i32
    return %c0_i32, %arg0 : i32, i32
  }
}

</mosaic_0001>

<llo_original>
// kernel: double_conv.1
$region0: #{double_conv.1}
  #allocation0 [shape = 'u32[]', space=smem, size = 0x4, offset = 0x4, fixed_abs, tag = 'smem constant byte address 0x4 - core index']
  #allocation1 [shape = 'u32[144,128]{1,0:T(1,128)}', space=vmem, size = 0x12000, scoped, tag = 'internal scratch']
  #allocation2 [shape = 'f32[12,512]{1,0:T(8,128)}', space=vmem, size = 0x8000, scoped, tag = 'scratch operand']
  #allocation3 [shape = 'f32[24,512]{1,0:T(8,128)}', space=vmem, size = 0xc000, scoped, tag = 'scratch operand']
  %s0 = inlined_call_operand.vmem [shape: f32[4,512], index: 0, kind: input, shape index: {}]
  %s1 = inlined_call_operand.vmem [shape: f32[4,512], index: 1, kind: input, shape index: {}]
  %s2 = inlined_call_operand.vmem [shape: f32[3,8,12], index: 2, kind: input, shape index: {}]
  %s3 = inlined_call_operand.vmem [shape: f32[8,1], index: 3, kind: input, shape index: {}]
  %s4 = inlined_call_operand.vmem [shape: f32[3,4,24], index: 4, kind: input, shape index: {}]
  %s5 = inlined_call_operand.vmem [shape: f32[4,1], index: 5, kind: input, shape index: {}]
  %s6 = inlined_call_operand.vmem [shape: f32[4,512], index: 6, kind: output, shape index: {}]
  %s7 = sld [smem:[#allocation0]]
  $region34: #{double_conv.1} parent=0
    _
  %s9 = ssub.s32 1, %s7
  %s10 = scalar_select 0, %s9, %s7
  // Predicated region
  $region2: #{double_conv.1} parent=0 // pred_check
    _
  $region3: #{double_conv.1} parent=0 // pred_check_branch
    %12 = sbr.rel (0) target = $region5
  $region4: #{double_conv.1} parent=0 // pred_region
    _
  $region5: #{double_conv.1} parent=0 // pred_fallthru
    _
  // Predicated region
  $region6: #{double_conv.1} parent=0 // pred_check
    _
  $region7: #{double_conv.1} parent=0 // pred_check_branch
    %14 = sbr.rel (0) target = $region9
  $region8: #{double_conv.1} parent=0 // pred_region
    _
  $region9: #{double_conv.1} parent=0 // pred_fallthru
    _
  // Predicated region
  $region10: #{double_conv.1} parent=0 // pred_check
    _
  $region11: #{double_conv.1} parent=0 // pred_check_branch
    %16 = sbr.rel (0) target = $region13
  $region12: #{double_conv.1} parent=0 // pred_region
    _
  $region13: #{double_conv.1} parent=0 // pred_fallthru
    _
  // Predicated region
  $region14: #{double_conv.1} parent=0 // pred_check
    _
  $region15: #{double_conv.1} parent=0 // pred_check_branch
    %18 = sbr.rel (0) target = $region17
  $region16: #{double_conv.1} parent=0 // pred_region
    _
  $region17: #{double_conv.1} parent=0 // pred_fallthru
    _
  // Predicated region
  $region18: #{double_conv.1} parent=0 // pred_check
    _
  $region19: #{double_conv.1} parent=0 // pred_check_branch
    %20 = sbr.rel (0) target = $region21
  $region20: #{double_conv.1} parent=0 // pred_region
    _
  $region21: #{double_conv.1} parent=0 // pred_fallthru
    _
  // Predicated region
  $region22: #{double_conv.1} parent=0 // pred_check
    _
  $region23: #{double_conv.1} parent=0 // pred_check_branch
    %22 = sbr.rel (0) target = $region25
  $region24: #{double_conv.1} parent=0 // pred_region
    _
  $region25: #{double_conv.1} parent=0 // pred_fallthru
    _
  %v23 = vld [vmem:[%s1] ss:$4 sm:$0xf]
  %s24 = scalar_lea.vmem %s1, 1
  %v25 = vld [vmem:[%s24] ss:$4 sm:$0xf]
  %s26 = scalar_lea.vmem %s1, 2
  %v27 = vld [vmem:[%s26] ss:$4 sm:$0xf]
  %s28 = scalar_lea.vmem %s1, 3
  %v29 = vld [vmem:[%s28] ss:$4 sm:$0xf]
  %v30 = vld [vmem:[%s0] sm:$0xff]
  %v31 = vld [vmem:[%s0 + $0x8] sm:$0xff]
  %v34 = vcombine.high %v30, %v30
  %v35 = vcombine.high %v31, %v31
  %38 = vrot.lane.b32.xlu0 %v30, 16
  %v39 = vpop.permute.xlu0 %38
  %40 = vrot.lane.b32.xlu0 %v34, 16
  %v41 = vpop.permute.xlu0 %40
  %42 = vrot.lane.b32.xlu0 %v31, 16
  %v43 = vpop.permute.xlu0 %42
  %44 = vrot.lane.b32.xlu0 %v35, 16
  %v45 = vpop.permute.xlu0 %44
  %v46 = vlaneseq
  %v47 = vand.u32 %v46, 127
  %vm48 = vcmp.lt.s32.totalorder %v47, 16
  %v49 = vsel %vm48, %v43, %v45
  %v50 = vsel %vm48, %v41, %v43
  %v51 = vsel %vm48, %v39, %v41
  %v52 = vsel %vm48, %v45, %v39
  %v54 = vlaneseq
  %v55 = vshrl.u32 %v54, 7
  %v56 = vsub.s32 0, %v55
  %v57 = vrot.slane %v23, %v56
  %v58 = vlaneseq
  %v59 = vshrl.u32 %v58, 7
  %v60 = vsub.s32 1, %v59
  %v61 = vrot.slane %v23, %v60
  %v62 = vlaneseq
  %v63 = vshrl.u32 %v62, 7
  %v64 = vsub.s32 2, %v63
  %v65 = vrot.slane %v23, %v64
  %v66 = vlaneseq
  %v67 = vshrl.u32 %v66, 7
  %v68 = vsub.s32 3, %v67
  %v69 = vrot.slane %v23, %v68
  %v74 = vmul.f32 %v52, %v57
  %v75 = vmul.f32 %v51, %v61
  %v76 = vmul.f32 %v50, %v65
  %v77 = vmul.f32 %v49, %v69
  %78 = vst [vmem:[#allocation2] sm:$0xf] %v74
  %79 = vst [vmem:[#allocation2 + $0x8] sm:$0xf] %v75
  %80 = vst [vmem:[#allocation2 + $0x10] sm:$0xf] %v76
  %81 = vst [vmem:[#allocation2 + $0x18] sm:$0xf] %v77
  %v82 = vcombine.low %v30, %v30
  %v83 = vcombine.low %v31, %v31
  %86 = vst [vmem:[#allocation2] sm:$0xf0] %v82
  %87 = vst [vmem:[#allocation2 + $0x8] sm:$0xf0] %v30
  %88 = vst [vmem:[#allocation2 + $0x10] sm:$0xf0] %v83
  %89 = vst [vmem:[#allocation2 + $0x18] sm:$0xf0] %v31
  %90 = vrot.lane.b32.xlu0 %v30, 112
  %v91 = vpop.permute.xlu0 %90
  %92 = vrot.lane.b32.xlu0 %v34, 112
  %v93 = vpop.permute.xlu0 %92
  %94 = vrot.lane.b32.xlu0 %v31, 112
  %v95 = vpop.permute.xlu0 %94
  %96 = vrot.lane.b32.xlu0 %v35, 112
  %v97 = vpop.permute.xlu0 %96
  %vm98 = vcmp.lt.s32.totalorder %v47, 112
  %v99 = vsel %vm98, %v95, %v97
  %v100 = vsel %vm98, %v93, %v95
  %v101 = vsel %vm98, %v91, %v93
  %v102 = vsel %vm98, %v97, %v91
  %v104 = vlaneseq
  %v105 = vshrl.u32 %v104, 7
  %v106 = vsub.s32 0, %v105
  %v107 = vrot.slane %v25, %v106
  %v108 = vlaneseq
  %v109 = vshrl.u32 %v108, 7
  %v110 = vsub.s32 1, %v109
  %v111 = vrot.slane %v25, %v110
  %v112 = vlaneseq
  %v113 = vshrl.u32 %v112, 7
  %v114 = vsub.s32 2, %v113
  %v115 = vrot.slane %v25, %v114
  %v116 = vlaneseq
  %v117 = vshrl.u32 %v116, 7
  %v118 = vsub.s32 3, %v117
  %v119 = vrot.slane %v25, %v118
  %v124 = vmul.f32 %v101, %v107
  %v125 = vmul.f32 %v100, %v111
  %v126 = vmul.f32 %v99, %v115
  %v127 = vmul.f32 %v102, %v119
  %128 = vst [vmem:[#allocation2 + $0x20] sm:$0xf] %v124
  %129 = vst [vmem:[#allocation2 + $0x28] sm:$0xf] %v125
  %130 = vst [vmem:[#allocation2 + $0x30] sm:$0xf] %v126
  %131 = vst [vmem:[#allocation2 + $0x38] sm:$0xf] %v127
  %v132 = vld [vmem:[#allocation2] sm:$0xff]
  %v133 = vld [vmem:[#allocation2 + $0x8] sm:$0xff]
  %v134 = vld [vmem:[#allocation2 + $0x10] sm:$0xff]
  %v135 = vld [vmem:[#allocation2 + $0x18] sm:$0xff]
  %v136 = vld [vmem:[#allocation2 + $0x20] sm:$0xf]
  %v137 = vld [vmem:[#allocation2 + $0x28] sm:$0xf]
  %v138 = vld [vmem:[#allocation2 + $0x30] sm:$0xf]
  %v139 = vld [vmem:[#allocation2 + $0x38] sm:$0xf]
  %v140 = vld [vmem:[%s2] sm:$0xff]
  %vm141 = vcmask 97280
  %v143 = vsel %vm141, %v140, 0
  %vm145 = vcmask 1043456
  %v147 = vsel %vm145, %v136, 0
  %v150 = vsel %vm145, %v137, 0
  %v153 = vsel %vm145, %v138, 0
  %v156 = vsel %vm145, %v139, 0
  %158 = vmatprep.subr.mxu0 %v133
  %159 = vmatpush1.msra.mxu0 %v132
  %160 = vmatprep.subr.mxu0 %v150
  %161 = vmatpush1.msra.mxu0 %v147
  %162 = vmatprep.subr.mxu0 0.0
  %163 = vmatpush1.msra.mxu0 0.0
  %164 = vmatprep.subr.mxu0 0.0
  %165 = vmatpush1.msra.mxu0 0.0
  %166 = vmatprep.subr.mxu0 0.0
  %167 = vmatpush1.msra.mxu0 0.0
  %168 = vmatprep.subr.mxu0 0.0
  %169 = vmatpush1.msra.mxu0 0.0
  %170 = vmatprep.subr.mxu0 0.0
  %171 = vmatpush1.msra.mxu0 0.0
  %172 = vmatprep.subr.mxu0 0.0
  %173 = vmatpush1.msra.mxu0 0.0
  %174 = vmatprep.subr.mxu0 0.0
  %175 = vmatpush1.msra.mxu0 0.0
  %176 = vmatprep.subr.mxu0 0.0
  %177 = vmatpush1.msra.mxu0 0.0
  %178 = vmatprep.subr.mxu0 0.0
  %179 = vmatpush1.msra.mxu0 0.0
  %180 = vmatprep.subr.mxu0 0.0
  %181 = vmatpush1.msra.mxu0 0.0
  %182 = vmatprep.subr.mxu0 0.0
  %183 = vmatpush1.msra.mxu0 0.0
  %184 = vmatprep.subr.mxu0 0.0
  %185 = vmatpush1.msra.mxu0 0.0
  %186 = vmatprep.subr.mxu0 0.0
  %187 = vmatpush1.msra.mxu0 0.0
  %188 = vmatprep.subr.mxu0 0.0
  %189 = vmatpush1.msra.mxu0 0.0
  %190 = vmatprep.subr.mxu0 0.0
  %191 = vmatpush1.msra.mxu0 0.0
  %192 = vmatprep.subr.mxu0 0.0
  %193 = vmatpush1.msra.mxu0 0.0
  %194 = vmatprep.subr.mxu0 0.0
  %195 = vmatpush1.msra.mxu0 0.0
  %196 = vmatprep.subr.mxu0 0.0
  %197 = vmatpush1.msra.mxu0 0.0
  %198 = vmatprep.subr.mxu0 0.0
  %199 = vmatpush1.msra.mxu0 0.0
  %200 = vmatprep.subr.mxu0 0.0
  %201 = vmatpush1.msra.mxu0 0.0
  %202 = vmatprep.subr.mxu0 0.0
  %203 = vmatpush1.msra.mxu0 0.0
  %204 = vmatprep.subr.mxu0 0.0
  %205 = vmatpush1.msra.mxu0 0.0
  %206 = vmatprep.subr.mxu0 0.0
  %207 = vmatpush1.msra.mxu0 0.0
  %208 = vmatprep.subr.mxu0 0.0
  %209 = vmatpush1.msra.mxu0 0.0
  %210 = vmatprep.subr.mxu0 0.0
  %211 = vmatpush1.msra.mxu0 0.0
  %212 = vmatprep.subr.mxu0 0.0
  %213 = vmatpush1.msra.mxu0 0.0
  %214 = vmatprep.subr.mxu0 0.0
  %215 = vmatpush1.msra.mxu0 0.0
  %216 = vmatprep.subr.mxu0 0.0
  %217 = vmatpush1.msra.mxu0 0.0
  %218 = vmatprep.subr.mxu0 0.0
  %219 = vmatpush1.msra.mxu0 0.0
  %220 = vmatprep.subr.mxu0 0.0
  %221 = vmatpush1.msra.mxu0 0.0
  %222 = vmatprep.mubr.f32.mxu0 0.0
  %223 = vmatmul.mubr.f32.gmra.mrb[0].mxu0 %v143
  %v224 = vpop.f32.mrb[0].mxu0
  %v225 = vadd.f32 0.0, %v224
  %v226 = vpop.f32.mrb[0].mxu0
  %v227 = vadd.f32 0.0, %v226
  %228 = vdwg.mxu0
  %229 = vmatprep.subr.mxu0 %v135
  %230 = vmatpush1.msra.mxu0 %v134
  %231 = vmatprep.subr.mxu0 %v156
  %232 = vmatpush1.msra.mxu0 %v153
  %233 = vmatprep.subr.mxu0 0.0
  %234 = vmatpush1.msra.mxu0 0.0
  %235 = vmatprep.subr.mxu0 0.0
  %236 = vmatpush1.msra.mxu0 0.0
  %237 = vmatprep.subr.mxu0 0.0
  %238 = vmatpush1.msra.mxu0 0.0
  %239 = vmatprep.subr.mxu0 0.0
  %240 = vmatpush1.msra.mxu0 0.0
  %241 = vmatprep.subr.mxu0 0.0
  %242 = vmatpush1.msra.mxu0 0.0
  %243 = vmatprep.subr.mxu0 0.0
  %244 = vmatpush1.msra.mxu0 0.0
  %245 = vmatprep.subr.mxu0 0.0
  %246 = vmatpush1.msra.mxu0 0.0
  %247 = vmatprep.subr.mxu0 0.0
  %248 = vmatpush1.msra.mxu0 0.0
  %249 = vmatprep.subr.mxu0 0.0
  %250 = vmatpush1.msra.mxu0 0.0
  %251 = vmatprep.subr.mxu0 0.0
  %252 = vmatpush1.msra.mxu0 0.0
  %253 = vmatprep.subr.mxu0 0.0
  %254 = vmatpush1.msra.mxu0 0.0
  %255 = vmatprep.subr.mxu0 0.0
  %256 = vmatpush1.msra.mxu0 0.0
  %257 = vmatprep.subr.mxu0 0.0
  %258 = vmatpush1.msra.mxu0 0.0
  %259 = vmatprep.subr.mxu0 0.0
  %260 = vmatpush1.msra.mxu0 0.0
  %261 = vmatprep.subr.mxu0 0.0
  %262 = vmatpush1.msra.mxu0 0.0
  %263 = vmatprep.subr.mxu0 0.0
  %264 = vmatpush1.msra.mxu0 0.0
  %265 = vmatprep.subr.mxu0 0.0
  %266 = vmatpush1.msra.mxu0 0.0
  %267 = vmatprep.subr.mxu0 0.0
  %268 = vmatpush1.msra.mxu0 0.0
  %269 = vmatprep.subr.mxu0 0.0
  %270 = vmatpush1.msra.mxu0 0.0
  %271 = vmatprep.subr.mxu0 0.0
  %272 = vmatpush1.msra.mxu0 0.0
  %273 = vmatprep.subr.mxu0 0.0
  %274 = vmatpush1.msra.mxu0 0.0
  %275 = vmatprep.subr.mxu0 0.0
  %276 = vmatpush1.msra.mxu0 0.0
  %277 = vmatprep.subr.mxu0 0.0
  %278 = vmatpush1.msra.mxu0 0.0
  %279 = vmatprep.subr.mxu0 0.0
  %280 = vmatpush1.msra.mxu0 0.0
  %281 = vmatprep.subr.mxu0 0.0
  %282 = vmatpush1.msra.mxu0 0.0
  %283 = vmatprep.subr.mxu0 0.0
  %284 = vmatpush1.msra.mxu0 0.0
  %285 = vmatprep.subr.mxu0 0.0
  %286 = vmatpush1.msra.mxu0 0.0
  %287 = vmatprep.subr.mxu0 0.0
  %288 = vmatpush1.msra.mxu0 0.0
  %289 = vmatprep.subr.mxu0 0.0
  %290 = vmatpush1.msra.mxu0 0.0
  %291 = vmatprep.subr.mxu0 0.0
  %292 = vmatpush1.msra.mxu0 0.0
  %293 = vmatprep.mubr.f32.mxu0 0.0
  %294 = vmatmul.mubr.f32.gmra.mrb[0].mxu0 %v143
  %v295 = vpop.f32.mrb[0].mxu0
  %v296 = vadd.f32 0.0, %v295
  %v297 = vpop.f32.mrb[0].mxu0
  %v298 = vadd.f32 0.0, %v297
  %299 = vdwg.mxu0
  %s300 = scalar_lea.vmem %s2, 8
  %v301 = vld [vmem:[%s300] sm:$0xff]
  %s302 = scalar_lea.vmem %s2, 16
  %v303 = vld [vmem:[%s302] sm:$0xff]
  %v305 = vsel %vm141, %v303, 0
  %307 = vmatprep.subr.mxu0 %v133
  %308 = vmatpush1.msra.mxu0 %v132
  %309 = vmatprep.subr.mxu0 %v150
  %310 = vmatpush1.msra.mxu0 %v147
  %311 = vmatprep.subr.mxu0 0.0
  %312 = vmatpush1.msra.mxu0 0.0
  %313 = vmatprep.subr.mxu0 0.0
  %314 = vmatpush1.msra.mxu0 0.0
  %315 = vmatprep.subr.mxu0 0.0
  %316 = vmatpush1.msra.mxu0 0.0
  %317 = vmatprep.subr.mxu0 0.0
  %318 = vmatpush1.msra.mxu0 0.0
  %319 = vmatprep.subr.mxu0 0.0
  %320 = vmatpush1.msra.mxu0 0.0
  %321 = vmatprep.subr.mxu0 0.0
  %322 = vmatpush1.msra.mxu0 0.0
  %323 = vmatprep.subr.mxu0 0.0
  %324 = vmatpush1.msra.mxu0 0.0
  %325 = vmatprep.subr.mxu0 0.0
  %326 = vmatpush1.msra.mxu0 0.0
  %327 = vmatprep.subr.mxu0 0.0
  %328 = vmatpush1.msra.mxu0 0.0
  %329 = vmatprep.subr.mxu0 0.0
  %330 = vmatpush1.msra.mxu0 0.0
  %331 = vmatprep.subr.mxu0 0.0
  %332 = vmatpush1.msra.mxu0 0.0
  %333 = vmatprep.subr.mxu0 0.0
  %334 = vmatpush1.msra.mxu0 0.0
  %335 = vmatprep.subr.mxu0 0.0
  %336 = vmatpush1.msra.mxu0 0.0
  %337 = vmatprep.subr.mxu0 0.0
  %338 = vmatpush1.msra.mxu0 0.0
  %339 = vmatprep.subr.mxu0 0.0
  %340 = vmatpush1.msra.mxu0 0.0
  %341 = vmatprep.subr.mxu0 0.0
  %342 = vmatpush1.msra.mxu0 0.0
  %343 = vmatprep.subr.mxu0 0.0
  %344 = vmatpush1.msra.mxu0 0.0
  %345 = vmatprep.subr.mxu0 0.0
  %346 = vmatpush1.msra.mxu0 0.0
  %347 = vmatprep.subr.mxu0 0.0
  %348 = vmatpush1.msra.mxu0 0.0
  %349 = vmatprep.subr.mxu0 0.0
  %350 = vmatpush1.msra.mxu0 0.0
  %351 = vmatprep.subr.mxu0 0.0
  %352 = vmatpush1.msra.mxu0 0.0
  %353 = vmatprep.subr.mxu0 0.0
  %354 = vmatpush1.msra.mxu0 0.0
  %355 = vmatprep.subr.mxu0 0.0
  %356 = vmatpush1.msra.mxu0 0.0
  %357 = vmatprep.subr.mxu0 0.0
  %358 = vmatpush1.msra.mxu0 0.0
  %359 = vmatprep.subr.mxu0 0.0
  %360 = vmatpush1.msra.mxu0 0.0
  %361 = vmatprep.subr.mxu0 0.0
  %362 = vmatpush1.msra.mxu0 0.0
  %363 = vmatprep.subr.mxu0 0.0
  %364 = vmatpush1.msra.mxu0 0.0
  %365 = vmatprep.subr.mxu0 0.0
  %366 = vmatpush1.msra.mxu0 0.0
  %367 = vmatprep.subr.mxu0 0.0
  %368 = vmatpush1.msra.mxu0 0.0
  %369 = vmatprep.subr.mxu0 0.0
  %370 = vmatpush1.msra.mxu0 0.0
  %371 = vmatprep.mubr.f32.mxu0 0.0
  %372 = vmatmul.mubr.f32.gmra.mrb[0].mxu0 %v305
  %v373 = vpop.f32.mrb[0].mxu0
  %v374 = vadd.f32 0.0, %v373
  %v375 = vpop.f32.mrb[0].mxu0
  %v376 = vadd.f32 0.0, %v375
  %377 = vdwg.mxu0
  %378 = vmatprep.subr.mxu0 %v135
  %379 = vmatpush1.msra.mxu0 %v134
  %380 = vmatprep.subr.mxu0 %v156
  %381 = vmatpush1.msra.mxu0 %v153
  %382 = vmatprep.subr.mxu0 0.0
  %383 = vmatpush1.msra.mxu0 0.0
  %384 = vmatprep.subr.mxu0 0.0
  %385 = vmatpush1.msra.mxu0 0.0
  %386 = vmatprep.subr.mxu0 0.0
  %387 = vmatpush1.msra.mxu0 0.0
  %388 = vmatprep.subr.mxu0 0.0
  %389 = vmatpush1.msra.mxu0 0.0
  %390 = vmatprep.subr.mxu0 0.0
  %391 = vmatpush1.msra.mxu0 0.0
  %392 = vmatprep.subr.mxu0 0.0
  %393 = vmatpush1.msra.mxu0 0.0
  %394 = vmatprep.subr.mxu0 0.0
  %395 = vmatpush1.msra.mxu0 0.0
  %396 = vmatprep.subr.mxu0 0.0
  %397 = vmatpush1.msra.mxu0 0.0
  %398 = vmatprep.subr.mxu0 0.0
  %399 = vmatpush1.msra.mxu0 0.0
  %400 = vmatprep.subr.mxu0 0.0
  %401 = vmatpush1.msra.mxu0 0.0
  %402 = vmatprep.subr.mxu0 0.0
  %403 = vmatpush1.msra.mxu0 0.0
  %404 = vmatprep.subr.mxu0 0.0
  %405 = vmatpush1.msra.mxu0 0.0
  %406 = vmatprep.subr.mxu0 0.0
  %407 = vmatpush1.msra.mxu0 0.0
  %408 = vmatprep.subr.mxu0 0.0
  %409 = vmatpush1.msra.mxu0 0.0
  %410 = vmatprep.subr.mxu0 0.0
  %411 = vmatpush1.msra.mxu0 0.0
  %412 = vmatprep.subr.mxu0 0.0
  %413 = vmatpush1.msra.mxu0 0.0
  %414 = vmatprep.subr.mxu0 0.0
  %415 = vmatpush1.msra.mxu0 0.0
  %416 = vmatprep.subr.mxu0 0.0
  %417 = vmatpush1.msra.mxu0 0.0
  %418 = vmatprep.subr.mxu0 0.0
  %419 = vmatpush1.msra.mxu0 0.0
  %420 = vmatprep.subr.mxu0 0.0
  %421 = vmatpush1.msra.mxu0 0.0
  %422 = vmatprep.subr.mxu0 0.0
  %423 = vmatpush1.msra.mxu0 0.0
  %424 = vmatprep.subr.mxu0 0.0
  %425 = vmatpush1.msra.mxu0 0.0
  %426 = vmatprep.subr.mxu0 0.0
  %427 = vmatpush1.msra.mxu0 0.0
  %428 = vmatprep.subr.mxu0 0.0
  %429 = vmatpush1.msra.mxu0 0.0
  %430 = vmatprep.subr.mxu0 0.0
  %431 = vmatpush1.msra.mxu0 0.0
  %432 = vmatprep.subr.mxu0 0.0
  %433 = vmatpush1.msra.mxu0 0.0
  %434 = vmatprep.subr.mxu0 0.0
  %435 = vmatpush1.msra.mxu0 0.0
  %436 = vmatprep.subr.mxu0 0.0
  %437 = vmatpush1.msra.mxu0 0.0
  %438 = vmatprep.subr.mxu0 0.0
  %439 = vmatpush1.msra.mxu0 0.0
  %440 = vmatprep.subr.mxu0 0.0
  %441 = vmatpush1.msra.mxu0 0.0
  %442 = vmatprep.mubr.f32.mxu0 0.0
  %443 = vmatmul.mubr.f32.gmra.mrb[0].mxu0 %v305
  %v444 = vpop.f32.mrb[0].mxu0
  %v445 = vadd.f32 0.0, %v444
  %v446 = vpop.f32.mrb[0].mxu0
  %v447 = vadd.f32 0.0, %v446
  %448 = vdwg.mxu0
  %449 = vrot.lane.b32.xlu0 %v225, 1
  %v450 = vpop.permute.xlu0 %449
  %451 = vrot.lane.b32.xlu0 %v227, 1
  %v452 = vpop.permute.xlu0 %451
  %453 = vrot.lane.b32.xlu0 %v296, 1
  %v454 = vpop.permute.xlu0 %453
  %455 = vrot.lane.b32.xlu0 %v298, 1
  %v456 = vpop.permute.xlu0 %455
  %vm457 = vcmp.lt.s32.totalorder %v47, 1
  %v458 = vsel %vm457, %v454, %v456
  %v459 = vsel %vm457, %v452, %v454
  %v460 = vsel %vm457, %v450, %v452
  %v461 = vsel %vm457, %v456, %v450
  %v463 = vlaneseq
  %v464 = vshrl.u32 %v463, 7
  %v465 = vsub.s32 0, %v464
  %v466 = vrot.slane %v27, %v465
  %v467 = vlaneseq
  %v468 = vshrl.u32 %v467, 7
  %v469 = vsub.s32 1, %v468
  %v470 = vrot.slane %v27, %v469
  %v471 = vlaneseq
  %v472 = vshrl.u32 %v471, 7
  %v473 = vsub.s32 2, %v472
  %v474 = vrot.slane %v27, %v473
  %v475 = vlaneseq
  %v476 = vshrl.u32 %v475, 7
  %v477 = vsub.s32 3, %v476
  %v478 = vrot.slane %v27, %v477
  %v483 = vmul.f32 %v461, %v466
  %v484 = vmul.f32 %v460, %v470
  %v485 = vmul.f32 %v459, %v474
  %v486 = vmul.f32 %v458, %v478
  %v488 = vsel %vm141, %v301, 0
  %490 = vmatprep.subr.mxu0 %v133
  %491 = vmatpush1.msra.mxu0 %v132
  %492 = vmatprep.subr.mxu0 %v150
  %493 = vmatpush1.msra.mxu0 %v147
  %494 = vmatprep.subr.mxu0 0.0
  %495 = vmatpush1.msra.mxu0 0.0
  %496 = vmatprep.subr.mxu0 0.0
  %497 = vmatpush1.msra.mxu0 0.0
  %498 = vmatprep.subr.mxu0 0.0
  %499 = vmatpush1.msra.mxu0 0.0
  %500 = vmatprep.subr.mxu0 0.0
  %501 = vmatpush1.msra.mxu0 0.0
  %502 = vmatprep.subr.mxu0 0.0
  %503 = vmatpush1.msra.mxu0 0.0
  %504 = vmatprep.subr.mxu0 0.0
  %505 = vmatpush1.msra.mxu0 0.0
  %506 = vmatprep.subr.mxu0 0.0
  %507 = vmatpush1.msra.mxu0 0.0
  %508 = vmatprep.subr.mxu0 0.0
  %509 = vmatpush1.msra.mxu0 0.0
  %510 = vmatprep.subr.mxu0 0.0
  %511 = vmatpush1.msra.mxu0 0.0
  %512 = vmatprep.subr.mxu0 0.0
  %513 = vmatpush1.msra.mxu0 0.0
  %514 = vmatprep.subr.mxu0 0.0
  %515 = vmatpush1.msra.mxu0 0.0
  %516 = vmatprep.subr.mxu0 0.0
  %517 = vmatpush1.msra.mxu0 0.0
  %518 = vmatprep.subr.mxu0 0.0
  %519 = vmatpush1.msra.mxu0 0.0
  %520 = vmatprep.subr.mxu0 0.0
  %521 = vmatpush1.msra.mxu0 0.0
  %522 = vmatprep.subr.mxu0 0.0
  %523 = vmatpush1.msra.mxu0 0.0
  %524 = vmatprep.subr.mxu0 0.0
  %525 = vmatpush1.msra.mxu0 0.0
  %526 = vmatprep.subr.mxu0 0.0
  %527 = vmatpush1.msra.mxu0 0.0
  %528 = vmatprep.subr.mxu0 0.0
  %529 = vmatpush1.msra.mxu0 0.0
  %530 = vmatprep.subr.mxu0 0.0
  %531 = vmatpush1.msra.mxu0 0.0
  %532 = vmatprep.subr.mxu0 0.0
  %533 = vmatpush1.msra.mxu0 0.0
  %534 = vmatprep.subr.mxu0 0.0
  %535 = vmatpush1.msra.mxu0 0.0
  %536 = vmatprep.subr.mxu0 0.0
  %537 = vmatpush1.msra.mxu0 0.0
  %538 = vmatprep.subr.mxu0 0.0
  %539 = vmatpush1.msra.mxu0 0.0
  %540 = vmatprep.subr.mxu0 0.0
  %541 = vmatpush1.msra.mxu0 0.0
  %542 = vmatprep.subr.mxu0 0.0
  %543 = vmatpush1.msra.mxu0 0.0
  %544 = vmatprep.subr.mxu0 0.0
  %545 = vmatpush1.msra.mxu0 0.0
  %546 = vmatprep.subr.mxu0 0.0
  %547 = vmatpush1.msra.mxu0 0.0
  %548 = vmatprep.subr.mxu0 0.0
  %549 = vmatpush1.msra.mxu0 0.0
  %550 = vmatprep.subr.mxu0 0.0
  %551 = vmatpush1.msra.mxu0 0.0
  %552 = vmatprep.subr.mxu0 0.0
  %553 = vmatpush1.msra.mxu0 0.0
  %554 = vmatprep.mubr.f32.mxu0 0.0
  %555 = vmatmul.mubr.f32.gmra.mrb[0].mxu0 %v488
  %v556 = vpop.f32.mrb[0].mxu0
  %v557 = vadd.f32 %v483, %v556
  %v558 = vpop.f32.mrb[0].mxu0
  %v559 = vadd.f32 %v484, %v558
  %560 = vdwg.mxu0
  %561 = vmatprep.subr.mxu0 %v135
  %562 = vmatpush1.msra.mxu0 %v134
  %563 = vmatprep.subr.mxu0 %v156
  %564 = vmatpush1.msra.mxu0 %v153
  %565 = vmatprep.subr.mxu0 0.0
  %566 = vmatpush1.msra.mxu0 0.0
  %567 = vmatprep.subr.mxu0 0.0
  %568 = vmatpush1.msra.mxu0 0.0
  %569 = vmatprep.subr.mxu0 0.0
  %570 = vmatpush1.msra.mxu0 0.0
  %571 = vmatprep.subr.mxu0 0.0
  %572 = vmatpush1.msra.mxu0 0.0
  %573 = vmatprep.subr.mxu0 0.0
  %574 = vmatpush1.msra.mxu0 0.0
  %575 = vmatprep.subr.mxu0 0.0
  %576 = vmatpush1.msra.mxu0 0.0
  %577 = vmatprep.subr.mxu0 0.0
  %578 = vmatpush1.msra.mxu0 0.0
  %579 = vmatprep.subr.mxu0 0.0
  %580 = vmatpush1.msra.mxu0 0.0
  %581 = vmatprep.subr.mxu0 0.0
  %582 = vmatpush1.msra.mxu0 0.0
  %583 = vmatprep.subr.mxu0 0.0
  %584 = vmatpush1.msra.mxu0 0.0
  %585 = vmatprep.subr.mxu0 0.0
  %586 = vmatpush1.msra.mxu0 0.0
  %587 = vmatprep.subr.mxu0 0.0
  %588 = vmatpush1.msra.mxu0 0.0
  %589 = vmatprep.subr.mxu0 0.0
  %590 = vmatpush1.msra.mxu0 0.0
  %591 = vmatprep.subr.mxu0 0.0
  %592 = vmatpush1.msra.mxu0 0.0
  %593 = vmatprep.subr.mxu0 0.0
  %594 = vmatpush1.msra.mxu0 0.0
  %595 = vmatprep.subr.mxu0 0.0
  %596 = vmatpush1.msra.mxu0 0.0
  %597 = vmatprep.subr.mxu0 0.0
  %598 = vmatpush1.msra.mxu0 0.0
  %599 = vmatprep.subr.mxu0 0.0
  %600 = vmatpush1.msra.mxu0 0.0
  %601 = vmatprep.subr.mxu0 0.0
  %602 = vmatpush1.msra.mxu0 0.0
  %603 = vmatprep.subr.mxu0 0.0
  %604 = vmatpush1.msra.mxu0 0.0
  %605 = vmatprep.subr.mxu0 0.0
  %606 = vmatpush1.msra.mxu0 0.0
  %607 = vmatprep.subr.mxu0 0.0
  %608 = vmatpush1.msra.mxu0 0.0
  %609 = vmatprep.subr.mxu0 0.0
  %610 = vmatpush1.msra.mxu0 0.0
  %611 = vmatprep.subr.mxu0 0.0
  %612 = vmatpush1.msra.mxu0 0.0
  %613 = vmatprep.subr.mxu0 0.0
  %614 = vmatpush1.msra.mxu0 0.0
  %615 = vmatprep.subr.mxu0 0.0
  %616 = vmatpush1.msra.mxu0 0.0
  %617 = vmatprep.subr.mxu0 0.0
  %618 = vmatpush1.msra.mxu0 0.0
  %619 = vmatprep.subr.mxu0 0.0
  %620 = vmatpush1.msra.mxu0 0.0
  %621 = vmatprep.subr.mxu0 0.0
  %622 = vmatpush1.msra.mxu0 0.0
  %623 = vmatprep.subr.mxu0 0.0
  %624 = vmatpush1.msra.mxu0 0.0
  %625 = vmatprep.mubr.f32.mxu0 0.0
  %626 = vmatmul.mubr.f32.gmra.mrb[0].mxu0 %v488
  %v627 = vpop.f32.mrb[0].mxu0
  %v628 = vadd.f32 %v485, %v627
  %v629 = vpop.f32.mrb[0].mxu0
  %v630 = vadd.f32 %v486, %v629
  %631 = vdwg.mxu0
  %632 = vrot.lane.b32.xlu0 %v374, 127
  %v633 = vpop.permute.xlu0 %632
  %634 = vrot.lane.b32.xlu0 %v376, 127
  %v635 = vpop.permute.xlu0 %634
  %636 = vrot.lane.b32.xlu0 %v445, 127
  %v637 = vpop.permute.xlu0 %636
  %638 = vrot.lane.b32.xlu0 %v447, 127
  %v639 = vpop.permute.xlu0 %638
  %vm640 = vcmp.lt.s32.totalorder %v47, 127
  %v641 = vsel %vm640, %v637, %v639
  %v642 = vsel %vm640, %v635, %v637
  %v643 = vsel %vm640, %v633, %v635
  %v644 = vsel %vm640, %v639, %v633
  %v646 = vlaneseq
  %v647 = vshrl.u32 %v646, 7
  %v648 = vsub.s32 0, %v647
  %v649 = vrot.slane %v29, %v648
  %v650 = vlaneseq
  %v651 = vshrl.u32 %v650, 7
  %v652 = vsub.s32 1, %v651
  %v653 = vrot.slane %v29, %v652
  %v654 = vlaneseq
  %v655 = vshrl.u32 %v654, 7
  %v656 = vsub.s32 2, %v655
  %v657 = vrot.slane %v29, %v656
  %v658 = vlaneseq
  %v659 = vshrl.u32 %v658, 7
  %v660 = vsub.s32 3, %v659
  %v661 = vrot.slane %v29, %v660
  %v666 = vmul.f32 %v643, %v649
  %v667 = vmul.f32 %v642, %v653
  %v668 = vmul.f32 %v641, %v657
  %v669 = vmul.f32 %v644, %v661
  %v670 = vadd.f32 %v557, %v666
  %v671 = vadd.f32 %v559, %v667
  %v672 = vadd.f32 %v628, %v668
  %v673 = vadd.f32 %v630, %v669
  %v674 = vld [vmem:[%s3] sm:$0xff]
  %676 = vset.pattern.permute.xlu0 0
  %677 = vperm.xlu0 %676, %v674
  %v678 = vpop.permute.xlu0 %677
  %v680 = vadd.f32 %v670, %v678
  %v681 = vadd.f32 %v671, %v678
  %v682 = vadd.f32 %v672, %v678
  %v683 = vadd.f32 %v673, %v678
  %v684 = vmax.f32 %v680, 0.0
  %v685 = vmax.f32 %v681, 0.0
  %v686 = vmax.f32 %v682, 0.0
  %v687 = vmax.f32 %v683, 0.0
  %688 = vrot.lane.b32.xlu0 %v684, 16
  %v689 = vpop.permute.xlu0 %688
  %690 = vrot.lane.b32.xlu0 %v685, 16
  %v691 = vpop.permute.xlu0 %690
  %692 = vrot.lane.b32.xlu0 %v686, 16
  %v693 = vpop.permute.xlu0 %692
  %694 = vrot.lane.b32.xlu0 %v687, 16
  %v695 = vpop.permute.xlu0 %694
  %v696 = vsel %vm48, %v693, %v695
  %v697 = vsel %vm48, %v691, %v693
  %v698 = vsel %vm48, %v689, %v691
  %v699 = vsel %vm48, %v695, %v689
  %v700 = vmul.f32 %v699, %v57
  %v701 = vmul.f32 %v698, %v61
  %v702 = vmul.f32 %v697, %v65
  %v703 = vmul.f32 %v696, %v69
  %704 = vst [vmem:[#allocation3] sm:$0xff] %v700
  %705 = vst [vmem:[#allocation3 + $0x8] sm:$0xff] %v701
  %706 = vst [vmem:[#allocation3 + $0x10] sm:$0xff] %v702
  %707 = vst [vmem:[#allocation3 + $0x18] sm:$0xff] %v703
  %708 = vst [vmem:[#allocation3 + $0x20] sm:$0xff] %v684
  %709 = vst [vmem:[#allocation3 + $0x28] sm:$0xff] %v685
  %710 = vst [vmem:[#allocation3 + $0x30] sm:$0xff] %v686
  %711 = vst [vmem:[#allocation3 + $0x38] sm:$0xff] %v687
  %712 = vrot.lane.b32.xlu0 %v684, 112
  %v713 = vpop.permute.xlu0 %712
  %714 = vrot.lane.b32.xlu0 %v685, 112
  %v715 = vpop.permute.xlu0 %714
  %716 = vrot.lane.b32.xlu0 %v686, 112
  %v717 = vpop.permute.xlu0 %716
  %718 = vrot.lane.b32.xlu0 %v687, 112
  %v719 = vpop.permute.xlu0 %718
  %v720 = vsel %vm98, %v717, %v719
  %v721 = vsel %vm98, %v715, %v717
  %v722 = vsel %vm98, %v713, %v715
  %v723 = vsel %vm98, %v719, %v713
  %v724 = vmul.f32 %v722, %v107
  %v725 = vmul.f32 %v721, %v111
  %v726 = vmul.f32 %v720, %v115
  %v727 = vmul.f32 %v723, %v119
  %728 = vst [vmem:[#allocation3 + $0x40] sm:$0xff] %v724
  %729 = vst [vmem:[#allocation3 + $0x48] sm:$0xff] %v725
  %730 = vst [vmem:[#allocation3 + $0x50] sm:$0xff] %v726
  %731 = vst [vmem:[#allocation3 + $0x58] sm:$0xff] %v727
  %v732 = vld [vmem:[#allocation3] sm:$0xff]
  %v733 = vld [vmem:[#allocation3 + $0x8] sm:$0xff]
  %v734 = vld [vmem:[#allocation3 + $0x10] sm:$0xff]
  %v735 = vld [vmem:[#allocation3 + $0x18] sm:$0xff]
  %v736 = vld [vmem:[#allocation3 + $0x20] sm:$0xff]
  %v737 = vld [vmem:[#allocation3 + $0x28] sm:$0xff]
  %v738 = vld [vmem:[#allocation3 + $0x30] sm:$0xff]
  %v739 = vld [vmem:[#allocation3 + $0x38] sm:$0xff]
  %v740 = vld [vmem:[#allocation3 + $0x40] sm:$0xff]
  %v741 = vld [vmem:[#allocation3 + $0x48] sm:$0xff]
  %v742 = vld [vmem:[#allocation3 + $0x50] sm:$0xff]
  %v743 = vld [vmem:[#allocation3 + $0x58] sm:$0xff]
  %v744 = vld [vmem:[%s4] sm:$0xf]
  %vm745 = vcmask 195584
  %v747 = vsel %vm745, %v744, 0
  %749 = vmatprep.subr.mxu0 %v733
  %750 = vmatpush1.msra.mxu0 %v732
  %751 = vmatprep.subr.mxu0 %v737
  %752 = vmatpush1.msra.mxu0 %v736
  %753 = vmatprep.subr.mxu0 %v741
  %754 = vmatpush1.msra.mxu0 %v740
  %755 = vmatprep.subr.mxu0 0.0
  %756 = vmatpush1.msra.mxu0 0.0
  %757 = vmatprep.subr.mxu0 0.0
  %758 = vmatpush1.msra.mxu0 0.0
  %759 = vmatprep.subr.mxu0 0.0
  %760 = vmatpush1.msra.mxu0 0.0
  %761 = vmatprep.subr.mxu0 0.0
  %762 = vmatpush1.msra.mxu0 0.0
  %763 = vmatprep.subr.mxu0 0.0
  %764 = vmatpush1.msra.mxu0 0.0
  %765 = vmatprep.subr.mxu0 0.0
  %766 = vmatpush1.msra.mxu0 0.0
  %767 = vmatprep.subr.mxu0 0.0
  %768 = vmatpush1.msra.mxu0 0.0
  %769 = vmatprep.subr.mxu0 0.0
  %770 = vmatpush1.msra.mxu0 0.0
  %771 = vmatprep.subr.mxu0 0.0
  %772 = vmatpush1.msra.mxu0 0.0
  %773 = vmatprep.subr.mxu0 0.0
  %774 = vmatpush1.msra.mxu0 0.0
  %775 = vmatprep.subr.mxu0 0.0
  %776 = vmatpush1.msra.mxu0 0.0
  %777 = vmatprep.subr.mxu0 0.0
  %778 = vmatpush1.msra.mxu0 0.0
  %779 = vmatprep.subr.mxu0 0.0
  %780 = vmatpush1.msra.mxu0 0.0
  %781 = vmatprep.subr.mxu0 0.0
  %782 = vmatpush1.msra.mxu0 0.0
  %783 = vmatprep.subr.mxu0 0.0
  %784 = vmatpush1.msra.mxu0 0.0
  %785 = vmatprep.subr.mxu0 0.0
  %786 = vmatpush1.msra.mxu0 0.0
  %787 = vmatprep.subr.mxu0 0.0
  %788 = vmatpush1.msra.mxu0 0.0
  %789 = vmatprep.subr.mxu0 0.0
  %790 = vmatpush1.msra.mxu0 0.0
  %791 = vmatprep.subr.mxu0 0.0
  %792 = vmatpush1.msra.mxu0 0.0
  %793 = vmatprep.subr.mxu0 0.0
  %794 = vmatpush1.msra.mxu0 0.0
  %795 = vmatprep.subr.mxu0 0.0
  %796 = vmatpush1.msra.mxu0 0.0
  %797 = vmatprep.subr.mxu0 0.0
  %798 = vmatpush1.msra.mxu0 0.0
  %799 = vmatprep.subr.mxu0 0.0
  %800 = vmatpush1.msra.mxu0 0.0
  %801 = vmatprep.subr.mxu0 0.0
  %802 = vmatpush1.msra.mxu0 0.0
  %803 = vmatprep.subr.mxu0 0.0
  %804 = vmatpush1.msra.mxu0 0.0
  %805 = vmatprep.subr.mxu0 0.0
  %806 = vmatpush1.msra.mxu0 0.0
  %807 = vmatprep.subr.mxu0 0.0
  %808 = vmatpush1.msra.mxu0 0.0
  %809 = vmatprep.subr.mxu0 0.0
  %810 = vmatpush1.msra.mxu0 0.0
  %811 = vmatprep.subr.mxu0 0.0
  %812 = vmatpush1.msra.mxu0 0.0
  %813 = vmatprep.mubr.f32.mxu0 0.0
  %814 = vmatmul.mubr.f32.gmra.mrb[0].mxu0 %v747
  %v815 = vpop.f32.mrb[0].mxu0
  %v816 = vadd.f32 0.0, %v815
  %v817 = vpop.f32.mrb[0].mxu0
  %v818 = vadd.f32 0.0, %v817
  %819 = vdwg.mxu0
  %820 = vmatprep.subr.mxu0 %v735
  %821 = vmatpush1.msra.mxu0 %v734
  %822 = vmatprep.subr.mxu0 %v739
  %823 = vmatpush1.msra.mxu0 %v738
  %824 = vmatprep.subr.mxu0 %v743
  %825 = vmatpush1.msra.mxu0 %v742
  %826 = vmatprep.subr.mxu0 0.0
  %827 = vmatpush1.msra.mxu0 0.0
  %828 = vmatprep.subr.mxu0 0.0
  %829 = vmatpush1.msra.mxu0 0.0
  %830 = vmatprep.subr.mxu0 0.0
  %831 = vmatpush1.msra.mxu0 0.0
  %832 = vmatprep.subr.mxu0 0.0
  %833 = vmatpush1.msra.mxu0 0.0
  %834 = vmatprep.subr.mxu0 0.0
  %835 = vmatpush1.msra.mxu0 0.0
  %836 = vmatprep.subr.mxu0 0.0
  %837 = vmatpush1.msra.mxu0 0.0
  %838 = vmatprep.subr.mxu0 0.0
  %839 = vmatpush1.msra.mxu0 0.0
  %840 = vmatprep.subr.mxu0 0.0
  %841 = vmatpush1.msra.mxu0 0.0
  %842 = vmatprep.subr.mxu0 0.0
  %843 = vmatpush1.msra.mxu0 0.0
  %844 = vmatprep.subr.mxu0 0.0
  %845 = vmatpush1.msra.mxu0 0.0
  %846 = vmatprep.subr.mxu0 0.0
  %847 = vmatpush1.msra.mxu0 0.0
  %848 = vmatprep.subr.mxu0 0.0
  %849 = vmatpush1.msra.mxu0 0.0
  %850 = vmatprep.subr.mxu0 0.0
  %851 = vmatpush1.msra.mxu0 0.0
  %852 = vmatprep.subr.mxu0 0.0
  %853 = vmatpush1.msra.mxu0 0.0
  %854 = vmatprep.subr.mxu0 0.0
  %855 = vmatpush1.msra.mxu0 0.0
  %856 = vmatprep.subr.mxu0 0.0
  %857 = vmatpush1.msra.mxu0 0.0
  %858 = vmatprep.subr.mxu0 0.0
  %859 = vmatpush1.msra.mxu0 0.0
  %860 = vmatprep.subr.mxu0 0.0
  %861 = vmatpush1.msra.mxu0 0.0
  %862 = vmatprep.subr.mxu0 0.0
  %863 = vmatpush1.msra.mxu0 0.0
  %864 = vmatprep.subr.mxu0 0.0
  %865 = vmatpush1.msra.mxu0 0.0
  %866 = vmatprep.subr.mxu0 0.0
  %867 = vmatpush1.msra.mxu0 0.0
  %868 = vmatprep.subr.mxu0 0.0
  %869 = vmatpush1.msra.mxu0 0.0
  %870 = vmatprep.subr.mxu0 0.0
  %871 = vmatpush1.msra.mxu0 0.0
  %872 = vmatprep.subr.mxu0 0.0
  %873 = vmatpush1.msra.mxu0 0.0
  %874 = vmatprep.subr.mxu0 0.0
  %875 = vmatpush1.msra.mxu0 0.0
  %876 = vmatprep.subr.mxu0 0.0
  %877 = vmatpush1.msra.mxu0 0.0
  %878 = vmatprep.subr.mxu0 0.0
  %879 = vmatpush1.msra.mxu0 0.0
  %880 = vmatprep.subr.mxu0 0.0
  %881 = vmatpush1.msra.mxu0 0.0
  %882 = vmatprep.subr.mxu0 0.0
  %883 = vmatpush1.msra.mxu0 0.0
  %884 = vmatprep.mubr.f32.mxu0 0.0
  %885 = vmatmul.mubr.f32.gmra.mrb[0].mxu0 %v747
  %v886 = vpop.f32.mrb[0].mxu0
  %v887 = vadd.f32 0.0, %v886
  %v888 = vpop.f32.mrb[0].mxu0
  %v889 = vadd.f32 0.0, %v888
  %890 = vdwg.mxu0
  %s891 = scalar_lea.vmem %s4, 4
  %v892 = vld [vmem:[%s891] sm:$0xf]
  %s893 = scalar_lea.vmem %s4, 8
  %v894 = vld [vmem:[%s893] sm:$0xf]
  %v896 = vsel %vm745, %v894, 0
  %898 = vmatprep.subr.mxu0 %v733
  %899 = vmatpush1.msra.mxu0 %v732
  %900 = vmatprep.subr.mxu0 %v737
  %901 = vmatpush1.msra.mxu0 %v736
  %902 = vmatprep.subr.mxu0 %v741
  %903 = vmatpush1.msra.mxu0 %v740
  %904 = vmatprep.subr.mxu0 0.0
  %905 = vmatpush1.msra.mxu0 0.0
  %906 = vmatprep.subr.mxu0 0.0
  %907 = vmatpush1.msra.mxu0 0.0
  %908 = vmatprep.subr.mxu0 0.0
  %909 = vmatpush1.msra.mxu0 0.0
  %910 = vmatprep.subr.mxu0 0.0
  %911 = vmatpush1.msra.mxu0 0.0
  %912 = vmatprep.subr.mxu0 0.0
  %913 = vmatpush1.msra.mxu0 0.0
  %914 = vmatprep.subr.mxu0 0.0
  %915 = vmatpush1.msra.mxu0 0.0
  %916 = vmatprep.subr.mxu0 0.0
  %917 = vmatpush1.msra.mxu0 0.0
  %918 = vmatprep.subr.mxu0 0.0
  %919 = vmatpush1.msra.mxu0 0.0
  %920 = vmatprep.subr.mxu0 0.0
  %921 = vmatpush1.msra.mxu0 0.0
  %922 = vmatprep.subr.mxu0 0.0
  %923 = vmatpush1.msra.mxu0 0.0
  %924 = vmatprep.subr.mxu0 0.0
  %925 = vmatpush1.msra.mxu0 0.0
  %926 = vmatprep.subr.mxu0 0.0
  %927 = vmatpush1.msra.mxu0 0.0
  %928 = vmatprep.subr.mxu0 0.0
  %929 = vmatpush1.msra.mxu0 0.0
  %930 = vmatprep.subr.mxu0 0.0
  %931 = vmatpush1.msra.mxu0 0.0
  %932 = vmatprep.subr.mxu0 0.0
  %933 = vmatpush1.msra.mxu0 0.0
  %934 = vmatprep.subr.mxu0 0.0
  %935 = vmatpush1.msra.mxu0 0.0
  %936 = vmatprep.subr.mxu0 0.0
  %937 = vmatpush1.msra.mxu0 0.0
  %938 = vmatprep.subr.mxu0 0.0
  %939 = vmatpush1.msra.mxu0 0.0
  %940 = vmatprep.subr.mxu0 0.0
  %941 = vmatpush1.msra.mxu0 0.0
  %942 = vmatprep.subr.mxu0 0.0
  %943 = vmatpush1.msra.mxu0 0.0
  %944 = vmatprep.subr.mxu0 0.0
  %945 = vmatpush1.msra.mxu0 0.0
  %946 = vmatprep.subr.mxu0 0.0
  %947 = vmatpush1.msra.mxu0 0.0
  %948 = vmatprep.subr.mxu0 0.0
  %949 = vmatpush1.msra.mxu0 0.0
  %950 = vmatprep.subr.mxu0 0.0
  %951 = vmatpush1.msra.mxu0 0.0
  %952 = vmatprep.subr.mxu0 0.0
  %953 = vmatpush1.msra.mxu0 0.0
  %954 = vmatprep.subr.mxu0 0.0
  %955 = vmatpush1.msra.mxu0 0.0
  %956 = vmatprep.subr.mxu0 0.0
  %957 = vmatpush1.msra.mxu0 0.0
  %958 = vmatprep.subr.mxu0 0.0
  %959 = vmatpush1.msra.mxu0 0.0
  %960 = vmatprep.subr.mxu0 0.0
  %961 = vmatpush1.msra.mxu0 0.0
  %962 = vmatprep.mubr.f32.mxu0 0.0
  %963 = vmatmul.mubr.f32.gmra.mrb[0].mxu0 %v896
  %v964 = vpop.f32.mrb[0].mxu0
  %v965 = vadd.f32 0.0, %v964
  %v966 = vpop.f32.mrb[0].mxu0
  %v967 = vadd.f32 0.0, %v966
  %968 = vdwg.mxu0
  %969 = vmatprep.subr.mxu0 %v735
  %970 = vmatpush1.msra.mxu0 %v734
  %971 = vmatprep.subr.mxu0 %v739
  %972 = vmatpush1.msra.mxu0 %v738
  %973 = vmatprep.subr.mxu0 %v743
  %974 = vmatpush1.msra.mxu0 %v742
  %975 = vmatprep.subr.mxu0 0.0
  %976 = vmatpush1.msra.mxu0 0.0
  %977 = vmatprep.subr.mxu0 0.0
  %978 = vmatpush1.msra.mxu0 0.0
  %979 = vmatprep.subr.mxu0 0.0
  %980 = vmatpush1.msra.mxu0 0.0
  %981 = vmatprep.subr.mxu0 0.0
  %982 = vmatpush1.msra.mxu0 0.0
  %983 = vmatprep.subr.mxu0 0.0
  %984 = vmatpush1.msra.mxu0 0.0
  %985 = vmatprep.subr.mxu0 0.0
  %986 = vmatpush1.msra.mxu0 0.0
  %987 = vmatprep.subr.mxu0 0.0
  %988 = vmatpush1.msra.mxu0 0.0
  %989 = vmatprep.subr.mxu0 0.0
  %990 = vmatpush1.msra.mxu0 0.0
  %991 = vmatprep.subr.mxu0 0.0
  %992 = vmatpush1.msra.mxu0 0.0
  %993 = vmatprep.subr.mxu0 0.0
  %994 = vmatpush1.msra.mxu0 0.0
  %995 = vmatprep.subr.mxu0 0.0
  %996 = vmatpush1.msra.mxu0 0.0
  %997 = vmatprep.subr.mxu0 0.0
  %998 = vmatpush1.msra.mxu0 0.0
  %999 = vmatprep.subr.mxu0 0.0
  %1000 = vmatpush1.msra.mxu0 0.0
  %1001 = vmatprep.subr.mxu0 0.0
  %1002 = vmatpush1.msra.mxu0 0.0
  %1003 = vmatprep.subr.mxu0 0.0
  %1004 = vmatpush1.msra.mxu0 0.0
  %1005 = vmatprep.subr.mxu0 0.0
  %1006 = vmatpush1.msra.mxu0 0.0
  %1007 = vmatprep.subr.mxu0 0.0
  %1008 = vmatpush1.msra.mxu0 0.0
  %1009 = vmatprep.subr.mxu0 0.0
  %1010 = vmatpush1.msra.mxu0 0.0
  %1011 = vmatprep.subr.mxu0 0.0
  %1012 = vmatpush1.msra.mxu0 0.0
  %1013 = vmatprep.subr.mxu0 0.0
  %1014 = vmatpush1.msra.mxu0 0.0
  %1015 = vmatprep.subr.mxu0 0.0
  %1016 = vmatpush1.msra.mxu0 0.0
  %1017 = vmatprep.subr.mxu0 0.0
  %1018 = vmatpush1.msra.mxu0 0.0
  %1019 = vmatprep.subr.mxu0 0.0
  %1020 = vmatpush1.msra.mxu0 0.0
  %1021 = vmatprep.subr.mxu0 0.0
  %1022 = vmatpush1.msra.mxu0 0.0
  %1023 = vmatprep.subr.mxu0 0.0
  %1024 = vmatpush1.msra.mxu0 0.0
  %1025 = vmatprep.subr.mxu0 0.0
  %1026 = vmatpush1.msra.mxu0 0.0
  %1027 = vmatprep.subr.mxu0 0.0
  %1028 = vmatpush1.msra.mxu0 0.0
  %1029 = vmatprep.subr.mxu0 0.0
  %1030 = vmatpush1.msra.mxu0 0.0
  %1031 = vmatprep.subr.mxu0 0.0
  %1032 = vmatpush1.msra.mxu0 0.0
  %1033 = vmatprep.mubr.f32.mxu0 0.0
  %1034 = vmatmul.mubr.f32.gmra.mrb[0].mxu0 %v896
  %v1035 = vpop.f32.mrb[0].mxu0
  %v1036 = vadd.f32 0.0, %v1035
  %v1037 = vpop.f32.mrb[0].mxu0
  %v1038 = vadd.f32 0.0, %v1037
  %1039 = vdwg.mxu0
  %1040 = vrot.lane.b32.xlu0 %v816, 1
  %v1041 = vpop.permute.xlu0 %1040
  %1042 = vrot.lane.b32.xlu0 %v818, 1
  %v1043 = vpop.permute.xlu0 %1042
  %1044 = vrot.lane.b32.xlu0 %v887, 1
  %v1045 = vpop.permute.xlu0 %1044
  %1046 = vrot.lane.b32.xlu0 %v889, 1
  %v1047 = vpop.permute.xlu0 %1046
  %v1048 = vsel %vm457, %v1045, %v1047
  %v1049 = vsel %vm457, %v1043, %v1045
  %v1050 = vsel %vm457, %v1041, %v1043
  %v1051 = vsel %vm457, %v1047, %v1041
  %v1052 = vmul.f32 %v1051, %v466
  %v1053 = vmul.f32 %v1050, %v470
  %v1054 = vmul.f32 %v1049, %v474
  %v1055 = vmul.f32 %v1048, %v478
  %v1057 = vsel %vm745, %v892, 0
  %1059 = vmatprep.subr.mxu0 %v733
  %1060 = vmatpush1.msra.mxu0 %v732
  %1061 = vmatprep.subr.mxu0 %v737
  %1062 = vmatpush1.msra.mxu0 %v736
  %1063 = vmatprep.subr.mxu0 %v741
  %1064 = vmatpush1.msra.mxu0 %v740
  %1065 = vmatprep.subr.mxu0 0.0
  %1066 = vmatpush1.msra.mxu0 0.0
  %1067 = vmatprep.subr.mxu0 0.0
  %1068 = vmatpush1.msra.mxu0 0.0
  %1069 = vmatprep.subr.mxu0 0.0
  %1070 = vmatpush1.msra.mxu0 0.0
  %1071 = vmatprep.subr.mxu0 0.0
  %1072 = vmatpush1.msra.mxu0 0.0
  %1073 = vmatprep.subr.mxu0 0.0
  %1074 = vmatpush1.msra.mxu0 0.0
  %1075 = vmatprep.subr.mxu0 0.0
  %1076 = vmatpush1.msra.mxu0 0.0
  %1077 = vmatprep.subr.mxu0 0.0
  %1078 = vmatpush1.msra.mxu0 0.0
  %1079 = vmatprep.subr.mxu0 0.0
  %1080 = vmatpush1.msra.mxu0 0.0
  %1081 = vmatprep.subr.mxu0 0.0
  %1082 = vmatpush1.msra.mxu0 0.0
  %1083 = vmatprep.subr.mxu0 0.0
  %1084 = vmatpush1.msra.mxu0 0.0
  %1085 = vmatprep.subr.mxu0 0.0
  %1086 = vmatpush1.msra.mxu0 0.0
  %1087 = vmatprep.subr.mxu0 0.0
  %1088 = vmatpush1.msra.mxu0 0.0
  %1089 = vmatprep.subr.mxu0 0.0
  %1090 = vmatpush1.msra.mxu0 0.0
  %1091 = vmatprep.subr.mxu0 0.0
  %1092 = vmatpush1.msra.mxu0 0.0
  %1093 = vmatprep.subr.mxu0 0.0
  %1094 = vmatpush1.msra.mxu0 0.0
  %1095 = vmatprep.subr.mxu0 0.0
  %1096 = vmatpush1.msra.mxu0 0.0
  %1097 = vmatprep.subr.mxu0 0.0
  %1098 = vmatpush1.msra.mxu0 0.0
  %1099 = vmatprep.subr.mxu0 0.0
  %1100 = vmatpush1.msra.mxu0 0.0
  %1101 = vmatprep.subr.mxu0 0.0
  %1102 = vmatpush1.msra.mxu0 0.0
  %1103 = vmatprep.subr.mxu0 0.0
  %1104 = vmatpush1.msra.mxu0 0.0
  %1105 = vmatprep.subr.mxu0 0.0
  %1106 = vmatpush1.msra.mxu0 0.0
  %1107 = vmatprep.subr.mxu0 0.0
  %1108 = vmatpush1.msra.mxu0 0.0
  %1109 = vmatprep.subr.mxu0 0.0
  %1110 = vmatpush1.msra.mxu0 0.0
  %1111 = vmatprep.subr.mxu0 0.0
  %1112 = vmatpush1.msra.mxu0 0.0
  %1113 = vmatprep.subr.mxu0 0.0
  %1114 = vmatpush1.msra.mxu0 0.0
  %1115 = vmatprep.subr.mxu0 0.0
  %1116 = vmatpush1.msra.mxu0 0.0
  %1117 = vmatprep.subr.mxu0 0.0
  %1118 = vmatpush1.msra.mxu0 0.0
  %1119 = vmatprep.subr.mxu0 0.0
  %1120 = vmatpush1.msra.mxu0 0.0
  %1121 = vmatprep.subr.mxu0 0.0
  %1122 = vmatpush1.msra.mxu0 0.0
  %1123 = vmatprep.mubr.f32.mxu0 0.0
  %1124 = vmatmul.mubr.f32.gmra.mrb[0].mxu0 %v1057
  %v1125 = vpop.f32.mrb[0].mxu0
  %v1126 = vadd.f32 %v1052, %v1125
  %v1127 = vpop.f32.mrb[0].mxu0
  %v1128 = vadd.f32 %v1053, %v1127
  %1129 = vdwg.mxu0
  %1130 = vmatprep.subr.mxu0 %v735
  %1131 = vmatpush1.msra.mxu0 %v734
  %1132 = vmatprep.subr.mxu0 %v739
  %1133 = vmatpush1.msra.mxu0 %v738
  %1134 = vmatprep.subr.mxu0 %v743
  %1135 = vmatpush1.msra.mxu0 %v742
  %1136 = vmatprep.subr.mxu0 0.0
  %1137 = vmatpush1.msra.mxu0 0.0
  %1138 = vmatprep.subr.mxu0 0.0
  %1139 = vmatpush1.msra.mxu0 0.0
  %1140 = vmatprep.subr.mxu0 0.0
  %1141 = vmatpush1.msra.mxu0 0.0
  %1142 = vmatprep.subr.mxu0 0.0
  %1143 = vmatpush1.msra.mxu0 0.0
  %1144 = vmatprep.subr.mxu0 0.0
  %1145 = vmatpush1.msra.mxu0 0.0
  %1146 = vmatprep.subr.mxu0 0.0
  %1147 = vmatpush1.msra.mxu0 0.0
  %1148 = vmatprep.subr.mxu0 0.0
  %1149 = vmatpush1.msra.mxu0 0.0
  %1150 = vmatprep.subr.mxu0 0.0
  %1151 = vmatpush1.msra.mxu0 0.0
  %1152 = vmatprep.subr.mxu0 0.0
  %1153 = vmatpush1.msra.mxu0 0.0
  %1154 = vmatprep.subr.mxu0 0.0
  %1155 = vmatpush1.msra.mxu0 0.0
  %1156 = vmatprep.subr.mxu0 0.0
  %1157 = vmatpush1.msra.mxu0 0.0
  %1158 = vmatprep.subr.mxu0 0.0
  %1159 = vmatpush1.msra.mxu0 0.0
  %1160 = vmatprep.subr.mxu0 0.0
  %1161 = vmatpush1.msra.mxu0 0.0
  %1162 = vmatprep.subr.mxu0 0.0
  %1163 = vmatpush1.msra.mxu0 0.0
  %1164 = vmatprep.subr.mxu0 0.0
  %1165 = vmatpush1.msra.mxu0 0.0
  %1166 = vmatprep.subr.mxu0 0.0
  %1167 = vmatpush1.msra.mxu0 0.0
  %1168 = vmatprep.subr.mxu0 0.0
  %1169 = vmatpush1.msra.mxu0 0.0
  %1170 = vmatprep.subr.mxu0 0.0
  %1171 = vmatpush1.msra.mxu0 0.0
  %1172 = vmatprep.subr.mxu0 0.0
  %1173 = vmatpush1.msra.mxu0 0.0
  %1174 = vmatprep.subr.mxu0 0.0
  %1175 = vmatpush1.msra.mxu0 0.0
  %1176 = vmatprep.subr.mxu0 0.0
  %1177 = vmatpush1.msra.mxu0 0.0
  %1178 = vmatprep.subr.mxu0 0.0
  %1179 = vmatpush1.msra.mxu0 0.0
  %1180 = vmatprep.subr.mxu0 0.0
  %1181 = vmatpush1.msra.mxu0 0.0
  %1182 = vmatprep.subr.mxu0 0.0
  %1183 = vmatpush1.msra.mxu0 0.0
  %1184 = vmatprep.subr.mxu0 0.0
  %1185 = vmatpush1.msra.mxu0 0.0
  %1186 = vmatprep.subr.mxu0 0.0
  %1187 = vmatpush1.msra.mxu0 0.0
  %1188 = vmatprep.subr.mxu0 0.0
  %1189 = vmatpush1.msra.mxu0 0.0
  %1190 = vmatprep.subr.mxu0 0.0
  %1191 = vmatpush1.msra.mxu0 0.0
  %1192 = vmatprep.subr.mxu0 0.0
  %1193 = vmatpush1.msra.mxu0 0.0
  %1194 = vmatprep.mubr.f32.mxu0 0.0
  %1195 = vmatmul.mubr.f32.gmra.mrb[0].mxu0 %v1057
  %v1196 = vpop.f32.mrb[0].mxu0
  %v1197 = vadd.f32 %v1054, %v1196
  %v1198 = vpop.f32.mrb[0].mxu0
  %v1199 = vadd.f32 %v1055, %v1198
  %1200 = vdwg.mxu0
  %1201 = vrot.lane.b32.xlu0 %v965, 127
  %v1202 = vpop.permute.xlu0 %1201
  %1203 = vrot.lane.b32.xlu0 %v967, 127
  %v1204 = vpop.permute.xlu0 %1203
  %1205 = vrot.lane.b32.xlu0 %v1036, 127
  %v1206 = vpop.permute.xlu0 %1205
  %1207 = vrot.lane.b32.xlu0 %v1038, 127
  %v1208 = vpop.permute.xlu0 %1207
  %v1209 = vsel %vm640, %v1206, %v1208
  %v1210 = vsel %vm640, %v1204, %v1206
  %v1211 = vsel %vm640, %v1202, %v1204
  %v1212 = vsel %vm640, %v1208, %v1202
  %v1213 = vmul.f32 %v1211, %v649
  %v1214 = vmul.f32 %v1210, %v653
  %v1215 = vmul.f32 %v1209, %v657
  %v1216 = vmul.f32 %v1212, %v661
  %v1217 = vadd.f32 %v1126, %v1213
  %v1218 = vadd.f32 %v1128, %v1214
  %v1219 = vadd.f32 %v1197, %v1215
  %v1220 = vadd.f32 %v1199, %v1216
  %v1221 = vld [vmem:[%s5] sm:$0xf]
  %1223 = vset.pattern.permute.xlu0 0
  %1224 = vperm.xlu0 %1223, %v1221
  %v1225 = vpop.permute.xlu0 %1224
  %v1227 = vadd.f32 %v1217, %v1225
  %v1228 = vadd.f32 %v1218, %v1225
  %v1229 = vadd.f32 %v1219, %v1225
  %v1230 = vadd.f32 %v1220, %v1225
  %v1231 = vmax.f32 %v1227, 0.0
  %v1232 = vmax.f32 %v1228, 0.0
  %v1233 = vmax.f32 %v1229, 0.0
  %v1234 = vmax.f32 %v1230, 0.0
  %v1239 = vcombine.low %v1231, %v1232
  %v1240 = vcombine.low %v1233, %v1234
  %1243 = vst [vmem:[%s6] sm:$0xff] %v1239
  %1244 = vst [vmem:[%s6 + $0x8] sm:$0xff] %v1240
  // Predicated region
  $region26: #{double_conv.1} parent=0 // pred_check
    _
  $region27: #{double_conv.1} parent=0 // pred_check_branch
    %1246 = sbr.rel (0) target = $region29
  $region28: #{double_conv.1} parent=0 // pred_region
    _
  $region29: #{double_conv.1} parent=0 // pred_fallthru
    _
  // Predicated region
  $region30: #{double_conv.1} parent=0 // pred_check
    _
  $region31: #{double_conv.1} parent=0 // pred_check_branch
    %1248 = sbr.rel (0) target = $region33
  $region32: #{double_conv.1} parent=0 // pred_region
    _
  $region33: #{double_conv.1} parent=0 // pred_fallthru
    _

</llo_original>
